<compile_context>
chip_gen: v6e
topology: v6e:2x2x1
jax: 0.10.0
libtpu: 0.0.40
codegen_flags: <defaults>
</compile_context>

<pallas_src>
import functools

import jax
import jax.numpy as jnp
from jax.experimental import pallas as pl
from jax.experimental.pallas import tpu as pltpu


def _round_up(x, m):
    return ((x + m - 1) // m) * m


def _pad2d(x, rows, cols):
    return jnp.pad(x, ((0, rows - x.shape[0]), (0, cols - x.shape[1])))


# ----------------------------------------------------------------------------
# Kernel 1 (small, runs once): project + normalize class features, emit them
# pre-transposed as bf16 [D_pad, Nc_pad] for lane-aligned MXU use downstream.
# ----------------------------------------------------------------------------
def _class_feat_kernel(pc_ref, w_ref, ct_ref, *, nc):
    c = jnp.dot(pc_ref[...].astype(jnp.bfloat16),
                w_ref[...].astype(jnp.bfloat16),
                preferred_element_type=jnp.float32)            # [Nc_pad, D_pad]
    # x / x.norm(dim=-1)  ==  x * rsqrt(sum(x^2))   (EUP rsqrt, no divide)
    c = c * jax.lax.rsqrt(jnp.sum(c * c, axis=-1, keepdims=True))
    # zero out padded class rows (their rsqrt(0) would otherwise be inf/NaN)
    row = jax.lax.broadcasted_iota(jnp.int32, (c.shape[0], 1), 0)
    c = jnp.where(row < nc, c, 0.0)
    ct_ref[...] = jnp.transpose(c).astype(jnp.bfloat16)        # [D_pad, Nc_pad]


# ----------------------------------------------------------------------------
# Kernel 2 (tiled over sentence rows): projection + normalize + logits +
# per-row cross-entropy NLL, all fused.
# ----------------------------------------------------------------------------
def _clip_fused_kernel(ps_ref, w_ref, ct_ref, lbl_ref,
                       logits_ref, nll_ref, *, nt, nc, tile_rows):
    i = pl.program_id(0)

    # --- text projection: [TM, H] @ [H, D] -> [TM, D]  (bf16 MXU, f32 acc) ---
    t = jnp.dot(ps_ref[...].astype(jnp.bfloat16),
                w_ref[...].astype(jnp.bfloat16),
                preferred_element_type=jnp.float32)

    # --- L2 normalize (rsqrt on EUP) ---
    t = t * jax.lax.rsqrt(jnp.sum(t * t, axis=-1, keepdims=True))

    # mask padded sentence rows (zero rows -> rsqrt(0) NaN; select drops it)
    row = jax.lax.broadcasted_iota(jnp.int32, (tile_rows, 1), 0) + i * tile_rows
    row_valid = row < nt
    t = jnp.where(row_valid, t, 0.0)

    # --- logits tile = t @ class_features.T  -> [TM, Nc_pad] ---
    logits = jnp.dot(t.astype(jnp.bfloat16), ct_ref[...],
                     preferred_element_type=jnp.float32)
    logits_ref[...] = logits

    # --- cross entropy (per-row NLL); padded class columns masked to -inf ---
    col = jax.lax.broadcasted_iota(jnp.int32, logits.shape, 1)
    masked = jnp.where(col < nc, logits, -jnp.inf)
    m = jnp.max(masked, axis=-1, keepdims=True)
    lse = m + jnp.log(jnp.sum(jnp.exp(masked - m), axis=-1, keepdims=True))
    picked = jnp.sum(jnp.where(col == lbl_ref[...], masked, 0.0),
                     axis=-1, keepdims=True)
    nll = lse - picked
    nll_ref[...] = jnp.where(row_valid, nll, 0.0)


# ----------------------------------------------------------------------------
# Wrapper: padding, tiling decisions, pallas_call plumbing
# ----------------------------------------------------------------------------
def clip_text_classifier(pooled_s, pooled_c, w_proj, labels):
    nt, h = pooled_s.shape
    nc = pooled_c.shape[0]
    d = w_proj.shape[1]

    h_pad = _round_up(h, 128)
    d_pad = _round_up(d, 128)
    nc_pad = _round_up(nc, 128)

    # Row tile: 256 rows for large batches (fits double-buffered in v7x's
    # 64 MiB VMEM at real CLIP D=512), otherwise a single sublane-aligned tile.
    tm = 256 if nt > 256 else _round_up(nt, 8)
    nt_pad = _round_up(nt, tm)
    grid_n = nt_pad // tm

    w_p = _pad2d(w_proj.astype(jnp.float32), h_pad, d_pad)
    pc_p = _pad2d(pooled_c.astype(jnp.float32), nc_pad, h_pad)
    ps_p = _pad2d(pooled_s.astype(jnp.float32), nt_pad, h_pad)
    lbl_p = jnp.pad(labels.astype(jnp.int32), (0, nt_pad - nt)).reshape(nt_pad, 1)

    # --- class features: one small whole-array kernel ---
    c_norm_t = pl.pallas_call(
        functools.partial(_class_feat_kernel, nc=nc),
        out_shape=jax.ShapeDtypeStruct((d_pad, nc_pad), jnp.bfloat16),
        in_specs=[pl.BlockSpec(memory_space=pltpu.MemorySpace.VMEM),
                  pl.BlockSpec(memory_space=pltpu.MemorySpace.VMEM)],
        out_specs=pl.BlockSpec(memory_space=pltpu.MemorySpace.VMEM),
    )(pc_p, w_p)

    # --- fused sentence-path kernel, tiled over rows ---
    logits_p, nll_rows = pl.pallas_call(
        functools.partial(_clip_fused_kernel, nt=nt, nc=nc, tile_rows=tm),
        out_shape=(jax.ShapeDtypeStruct((nt_pad, nc_pad), jnp.float32),
                   jax.ShapeDtypeStruct((nt_pad, 1), jnp.float32)),
        grid_spec=pltpu.PrefetchScalarGridSpec(
            num_scalar_prefetch=0,
            grid=(grid_n,),
            in_specs=[pl.BlockSpec((tm, h_pad), lambda i: (i, 0)),      # pooled
                      pl.BlockSpec((h_pad, d_pad), lambda i: (0, 0)),   # w_proj
                      pl.BlockSpec((d_pad, nc_pad), lambda i: (0, 0)),  # classT
                      pl.BlockSpec((tm, 1), lambda i: (i, 0))],         # labels
            out_specs=[pl.BlockSpec((tm, nc_pad), lambda i: (i, 0)),
                       pl.BlockSpec((tm, 1), lambda i: (i, 0))]),
        compiler_params=pltpu.CompilerParams(
            dimension_semantics=("parallel",)),
    )(ps_p, w_p, c_norm_t, lbl_p)

    logits = logits_p[:nt, :nc]
    loss = jnp.sum(nll_rows) / nt          # CrossEntropyLoss mean reduction
    return loss, logits


# ----------------------------------------------------------------------------
# Simplified CLIP text encoder glue (EOS/last-token pooling only)
# ----------------------------------------------------------------------------
def get_pooled_text(token_ids, token_emb, pos_emb):
    # TODO(synk): the pretrained CLIP tokenizer + text-transformer stack has no
    # self-contained equivalent; replaced by deterministic embed + EOS(last)-
    # token pooling. Only the EOS token is gathered (no [N, S, H] intermediate).
    return token_emb[token_ids[:, -1]] + pos_emb[-1][None, :]     # [N, H]


def my_model_forward(sentence_ids, class_ids, labels, params):
    pooled_s = get_pooled_text(sentence_ids, params["token_emb"],
                               params["pos_emb"])
    pooled_c = get_pooled_text(class_ids, params["token_emb"],
                               params["pos_emb"])
    return clip_text_classifier(pooled_s, pooled_c, params["w_proj"], labels)


if __name__ == "__main__":
    key = jax.random.PRNGKey(0)
    k1, k2, k3, k4, k5, k6 = jax.random.split(key, 6)

    VOCAB, SEQ, HIDDEN, PROJ = 64, 8, 32, 32
    N_SENT, N_CLS = 4, 3

    params = {
        "token_emb": 0.02 * jax.random.normal(k1, (VOCAB, HIDDEN), jnp.float32),
        "pos_emb":   0.02 * jax.random.normal(k2, (SEQ, HIDDEN), jnp.float32),
        "w_proj":    0.05 * jax.random.normal(k3, (HIDDEN, PROJ), jnp.float32),
    }

    sentence_ids = jax.random.randint(k4, (N_SENT, SEQ), 0, VOCAB, jnp.int32)
    class_ids = jax.random.randint(k5, (N_CLS, SEQ), 0, VOCAB, jnp.int32)
    labels = jax.random.randint(k6, (N_SENT,), 0, N_CLS, jnp.int32)

    loss, logits = my_model_forward(sentence_ids, class_ids, labels, params)
    jax.block_until_ready((loss, logits))

    assert logits.shape == (N_SENT, N_CLS)
    assert loss.shape == ()
    assert bool(jnp.isfinite(loss))
    print("KERNEL_OK")
</pallas_src>

<mosaic_0001>
module attributes {stable_mosaic.version = 11 : i64} {
  func.func @_class_feat_kernel(%arg0: memref<128x128xf32, #tpu.memory_space<vmem>>, %arg1: memref<128x128xf32, #tpu.memory_space<vmem>>, %arg2: memref<128x128xbf16, #tpu.memory_space<vmem>>) attributes {dimension_semantics = [], scalar_prefetch = 0 : i64, scratch_operands = 0 : i64, tpu.core_type = #tpu.core_type<tc>} {
    %c0 = arith.constant 0 : index
    %c0_0 = arith.constant 0 : index
    %0 = vector.load %arg0[%c0, %c0_0] : memref<128x128xf32, #tpu.memory_space<vmem>>, vector<128x128xf32>
    %1 = arith.truncf %0 : vector<128x128xf32> to vector<128x128xbf16>
    %c0_1 = arith.constant 0 : index
    %c0_2 = arith.constant 0 : index
    %2 = vector.load %arg1[%c0_1, %c0_2] : memref<128x128xf32, #tpu.memory_space<vmem>>, vector<128x128xf32>
    %3 = arith.truncf %2 : vector<128x128xf32> to vector<128x128xbf16>
    %cst = arith.constant dense<0.000000e+00> : vector<128x128xf32>
    %4 = tpu.matmul %1, %3, %cst {dimension_numbers = #tpu.dot_dimension_numbers<[1], [0], [0], [1], [0, 0, 1, 1], [], []>} : vector<128x128xbf16>, vector<128x128xbf16>, vector<128x128xf32> -> vector<128x128xf32>
    %5 = arith.mulf %4, %4 : vector<128x128xf32>
    %cst_3 = arith.constant dense<0.000000e+00> : vector<128xf32>
    %6 = vector.multi_reduction <add>, %5, %cst_3 [1] : vector<128x128xf32> to vector<128xf32>
    %7 = vector.shape_cast %6 : vector<128xf32> to vector<128x1xf32>
    %8 = math.rsqrt %7 : vector<128x1xf32>
    %9 = vector.broadcast %8 : vector<128x1xf32> to vector<128x128xf32>
    %10 = arith.mulf %4, %9 : vector<128x128xf32>
    %11 = tpu.iota {dimensions = array<i32: 0>} : vector<128x1xi32>
    %c3_i32 = arith.constant 3 : i32
    %12 = vector.broadcast %c3_i32 : i32 to vector<128x1xi32>
    %13 = arith.cmpi slt, %11, %12 : vector<128x1xi32>
    %cst_4 = arith.constant 0.000000e+00 : f32
    %14 = vector.shape_cast %13 : vector<128x1xi1> to vector<128x1xi1>
    %15 = vector.broadcast %14 : vector<128x1xi1> to vector<128x128xi1>
    %16 = vector.broadcast %cst_4 : f32 to vector<128x128xf32>
    %17 = arith.select %15, %10, %16 : vector<128x128xi1>, vector<128x128xf32>
    %18 = tpu.transpose %17, [1, 0] : vector<128x128xf32> -> vector<128x128xf32>
    %19 = arith.truncf %18 : vector<128x128xf32> to vector<128x128xbf16>
    %c0_5 = arith.constant 0 : index
    %c0_6 = arith.constant 0 : index
    %20 = vector.load %arg2[%c0_5, %c0_6] : memref<128x128xbf16, #tpu.memory_space<vmem>>, vector<128x128xbf16>
    tpu.vector_store %arg2[%c0_5, %c0_6], %19 {strides = array<i32>} : memref<128x128xbf16, #tpu.memory_space<vmem>>, vector<128x128xbf16>,
    return
  }
}

</mosaic_0001>

<llo_original>
// kernel: tpu_custom_call.1
$region0: #{tpu_custom_call.1}
  #allocation0 [shape = 'u32[]', space=smem, size = 0x4, offset = 0x4, fixed_abs, tag = 'smem constant byte address 0x4 - core index']
  #allocation1 [shape = 'u32[144,128]{1,0:T(1,128)}', space=vmem, size = 0x12000, scoped, tag = 'internal scratch']
  %s0 = inlined_call_operand.hbm [shape: f32[128,128], index: 0, kind: input, shape index: {}]
  %s1 = inlined_call_operand.hbm [shape: f32[128,128], index: 1, kind: input, shape index: {}]
  %s2 = inlined_call_operand.hbm [shape: bf16[128,128], index: 2, kind: output, shape index: {}]
  %s3 = sld [smem:[#allocation0]]
  $region26: #{tpu_custom_call.1} parent=0
    _
  %s5 = ssub.s32 1, %s3
  %s6 = scalar_select 0, %s5, %s3
  $region1: #{tpu_custom_call.1} parent=0
    #allocation2 [shape = 'u8[65536]{0}', space=vmem, size = 0x10000, scoped, tag = 'input window, operand 0, single buffered']
    #allocation3 [shape = 's32[1]{0}', space=sflag, size = 0x4, scoped, tag = 'scoped memory for tpu_custom_call.1']
    #allocation4 [shape = 's32[1]{0}', space=sflag, size = 0x4, scoped, tag = 'scoped memory for tpu_custom_call.1']
    #allocation5 [shape = 'u8[65536]{0}', space=vmem, size = 0x10000, scoped, tag = 'input window, operand 1, single buffered']
    #allocation6 [shape = 's32[1]{0}', space=sflag, size = 0x4, scoped, tag = 'scoped memory for tpu_custom_call.1']
    #allocation7 [shape = 'u8[32768]{0}', space=vmem, size = 0x8000, scoped, tag = 'output window, operand 0, single buffered']
    %7 = vsyncpa [#allocation3], 0
    %8 = vsyncpa [#allocation6], 0
    %9 = vsyncpa [#allocation4], 0
    // Predicated region
    $region2: #{tpu_custom_call.1} parent=1 // pred_check
      _
    $region3: #{tpu_custom_call.1} parent=1 // pred_check_branch
      %11 = sbr.rel (0) target = $region5
    $region4: #{tpu_custom_call.1} parent=1 // pred_region
      %s13 = ssub.s32 2048, 2048
      %14 = vsyncadd [#allocation3], %s13
      %s15 = sshll.u32 [#allocation2], 4
      %s16 = int_to_ptr.vmem [resolvable:$true] %s15
      %21 = dma.hbm_to_vmem [thread:$0]  %s0, 2048, %s16, [#allocation3], 128, 128, 8
    $region5: #{tpu_custom_call.1} parent=1 // pred_fallthru
      _
    // Predicated region
    $region6: #{tpu_custom_call.1} parent=1 // pred_check
      _
    $region7: #{tpu_custom_call.1} parent=1 // pred_check_branch
      %23 = sbr.rel (0) target = $region9
    $region8: #{tpu_custom_call.1} parent=1 // pred_region
      %s25 = ssub.s32 2048, 2048
      %26 = vsyncadd [#allocation6], %s25
      %s27 = sshll.u32 [#allocation5], 4
      %s28 = int_to_ptr.vmem [resolvable:$true] %s27
      %33 = dma.hbm_to_vmem [thread:$0]  %s1, 2048, %s28, [#allocation6], 128, 128, 8
    $region9: #{tpu_custom_call.1} parent=1 // pred_fallthru
      _
    // Predicated region
    $region10: #{tpu_custom_call.1} parent=1 // pred_check
      _
    $region11: #{tpu_custom_call.1} parent=1 // pred_check_branch
      %35 = sbr.rel (0) target = $region13
    $region12: #{tpu_custom_call.1} parent=1 // pred_region
      %36 = dma.done [#allocation3], 2048
    $region13: #{tpu_custom_call.1} parent=1 // pred_fallthru
      _
    // Predicated region
    $region14: #{tpu_custom_call.1} parent=1 // pred_check
      _
    $region15: #{tpu_custom_call.1} parent=1 // pred_check_branch
      %38 = sbr.rel (0) target = $region17
    $region16: #{tpu_custom_call.1} parent=1 // pred_region
      %39 = dma.done [#allocation6], 2048
    $region17: #{tpu_custom_call.1} parent=1 // pred_fallthru
      _
    %v41 = vld [vmem:[#allocation2] sm:$0xff]
    %v42 = vld [vmem:[#allocation2 + $0x8] sm:$0xff]
    %v43 = vld [vmem:[#allocation2 + $0x10] sm:$0xff]
    %v44 = vld [vmem:[#allocation2 + $0x18] sm:$0xff]
    %v45 = vld [vmem:[#allocation2 + $0x20] sm:$0xff]
    %v46 = vld [vmem:[#allocation2 + $0x28] sm:$0xff]
    %v47 = vld [vmem:[#allocation2 + $0x30] sm:$0xff]
    %v48 = vld [vmem:[#allocation2 + $0x38] sm:$0xff]
    %v49 = vld [vmem:[#allocation2 + $0x40] sm:$0xff]
    %v50 = vld [vmem:[#allocation2 + $0x48] sm:$0xff]
    %v51 = vld [vmem:[#allocation2 + $0x50] sm:$0xff]
    %v52 = vld [vmem:[#allocation2 + $0x58] sm:$0xff]
    %v53 = vld [vmem:[#allocation2 + $0x60] sm:$0xff]
    %v54 = vld [vmem:[#allocation2 + $0x68] sm:$0xff]
    %v55 = vld [vmem:[#allocation2 + $0x70] sm:$0xff]
    %v56 = vld [vmem:[#allocation2 + $0x78] sm:$0xff]
    %v57 = vpack.c.bf16 %v42, %v41
    %v58 = vpack.c.bf16 %v44, %v43
    %v59 = vpack.c.bf16 %v46, %v45
    %v60 = vpack.c.bf16 %v48, %v47
    %v61 = vpack.c.bf16 %v50, %v49
    %v62 = vpack.c.bf16 %v52, %v51
    %v63 = vpack.c.bf16 %v54, %v53
    %v64 = vpack.c.bf16 %v56, %v55
    %v65 = vld [vmem:[#allocation5] sm:$0xff]
    %v66 = vld [vmem:[#allocation5 + $0x8] sm:$0xff]
    %v67 = vld [vmem:[#allocation5 + $0x10] sm:$0xff]
    %v68 = vld [vmem:[#allocation5 + $0x18] sm:$0xff]
    %v69 = vld [vmem:[#allocation5 + $0x20] sm:$0xff]
    %v70 = vld [vmem:[#allocation5 + $0x28] sm:$0xff]
    %v71 = vld [vmem:[#allocation5 + $0x30] sm:$0xff]
    %v72 = vld [vmem:[#allocation5 + $0x38] sm:$0xff]
    %v73 = vld [vmem:[#allocation5 + $0x40] sm:$0xff]
    %v74 = vld [vmem:[#allocation5 + $0x48] sm:$0xff]
    %v75 = vld [vmem:[#allocation5 + $0x50] sm:$0xff]
    %v76 = vld [vmem:[#allocation5 + $0x58] sm:$0xff]
    %v77 = vld [vmem:[#allocation5 + $0x60] sm:$0xff]
    %v78 = vld [vmem:[#allocation5 + $0x68] sm:$0xff]
    %v79 = vld [vmem:[#allocation5 + $0x70] sm:$0xff]
    %v80 = vld [vmem:[#allocation5 + $0x78] sm:$0xff]
    %v81 = vpack.c.bf16 %v66, %v65
    %v82 = vpack.c.bf16 %v68, %v67
    %v83 = vpack.c.bf16 %v70, %v69
    %v84 = vpack.c.bf16 %v72, %v71
    %v85 = vpack.c.bf16 %v74, %v73
    %v86 = vpack.c.bf16 %v76, %v75
    %v87 = vpack.c.bf16 %v78, %v77
    %v88 = vpack.c.bf16 %v80, %v79
    %89 = vmatprep.subr.bf16.mxu0 0
    %90 = vmatpush1.bf16.msra.mxu0 %v88
    %91 = vmatprep.subr.bf16.mxu0 0
    %92 = vmatpush1.bf16.msra.mxu0 %v87
    %93 = vmatprep.subr.bf16.mxu0 0
    %94 = vmatpush1.bf16.msra.mxu0 %v86
    %95 = vmatprep.subr.bf16.mxu0 0
    %96 = vmatpush1.bf16.msra.mxu0 %v85
    %97 = vmatprep.subr.bf16.mxu0 0
    %98 = vmatpush1.bf16.msra.mxu0 %v84
    %99 = vmatprep.subr.bf16.mxu0 0
    %100 = vmatpush1.bf16.msra.mxu0 %v83
    %101 = vmatprep.subr.bf16.mxu0 0
    %102 = vmatpush1.bf16.msra.mxu0 %v82
    %103 = vmatprep.subr.bf16.mxu0 0
    %104 = vmatpush1.bf16.msra.mxu0 %v81
    %105 = vmatprep.subr.bf16.mxu0 0
    %106 = vmatpush2.bf16.msra.mxu0 0
    %107 = vmatprep.subr.bf16.mxu0 0
    %108 = vmatpush2.bf16.msra.mxu0 0
    %109 = vmatprep.subr.bf16.mxu0 0
    %110 = vmatpush2.bf16.msra.mxu0 0
    %111 = vmatprep.subr.bf16.mxu0 0
    %112 = vmatpush2.bf16.msra.mxu0 0
    %113 = vmatprep.subr.bf16.mxu0 0
    %114 = vmatpush2.bf16.msra.mxu0 0
    %115 = vmatprep.subr.bf16.mxu0 0
    %116 = vmatpush2.bf16.msra.mxu0 0
    %117 = vmatprep.subr.bf16.mxu0 0
    %118 = vmatpush2.bf16.msra.mxu0 0
    %119 = vmatprep.subr.bf16.mxu0 0
    %120 = vmatpush2.bf16.msra.mxu0 0
    %121 = vmatprep.mubr.bf16.mxu0 0
    %122 = vmatmul.mubr.bf16.gmra.mxu0 %v57
    %v123 = vpop.f32.mrf.mxu0
    %v124 = vadd.f32 0.0, %v123
    %v125 = vpop.f32.mrf.mxu0
    %v126 = vpop.f32.mrf.mxu0
    %v127 = vadd.f32 0.0, %v126
    %v128 = vpop.f32.mrf.mxu0
    %129 = vmatprep.mubr.bf16.mxu0 0
    %130 = vmatmul.mubr.bf16.gmra.mxu0 %v58
    %v131 = vpop.f32.mrf.mxu0
    %v132 = vadd.f32 0.0, %v131
    %v133 = vpop.f32.mrf.mxu0
    %v134 = vpop.f32.mrf.mxu0
    %v135 = vadd.f32 0.0, %v134
    %v136 = vpop.f32.mrf.mxu0
    %137 = vmatprep.mubr.bf16.mxu0 0
    %138 = vmatmul.mubr.bf16.gmra.mxu0 %v59
    %v139 = vpop.f32.mrf.mxu0
    %v140 = vadd.f32 0.0, %v139
    %v141 = vpop.f32.mrf.mxu0
    %v142 = vpop.f32.mrf.mxu0
    %v143 = vadd.f32 0.0, %v142
    %v144 = vpop.f32.mrf.mxu0
    %145 = vmatprep.mubr.bf16.mxu0 0
    %146 = vmatmul.mubr.bf16.gmra.mxu0 %v60
    %v147 = vpop.f32.mrf.mxu0
    %v148 = vadd.f32 0.0, %v147
    %v149 = vpop.f32.mrf.mxu0
    %v150 = vpop.f32.mrf.mxu0
    %v151 = vadd.f32 0.0, %v150
    %v152 = vpop.f32.mrf.mxu0
    %153 = vmatprep.mubr.bf16.mxu0 0
    %154 = vmatmul.mubr.bf16.gmra.mxu0 %v61
    %v155 = vpop.f32.mrf.mxu0
    %v156 = vadd.f32 0.0, %v155
    %v157 = vpop.f32.mrf.mxu0
    %v158 = vpop.f32.mrf.mxu0
    %v159 = vadd.f32 0.0, %v158
    %v160 = vpop.f32.mrf.mxu0
    %161 = vmatprep.mubr.bf16.mxu0 0
    %162 = vmatmul.mubr.bf16.gmra.mxu0 %v62
    %v163 = vpop.f32.mrf.mxu0
    %v164 = vadd.f32 0.0, %v163
    %v165 = vpop.f32.mrf.mxu0
    %v166 = vpop.f32.mrf.mxu0
    %v167 = vadd.f32 0.0, %v166
    %v168 = vpop.f32.mrf.mxu0
    %169 = vmatprep.mubr.bf16.mxu0 0
    %170 = vmatmul.mubr.bf16.gmra.mxu0 %v63
    %v171 = vpop.f32.mrf.mxu0
    %v172 = vadd.f32 0.0, %v171
    %v173 = vpop.f32.mrf.mxu0
    %v174 = vpop.f32.mrf.mxu0
    %v175 = vadd.f32 0.0, %v174
    %v176 = vpop.f32.mrf.mxu0
    %177 = vmatprep.mubr.bf16.mxu0 0
    %178 = vmatmul.mubr.bf16.gmra.mxu0 %v64
    %v179 = vpop.f32.mrf.mxu0
    %v180 = vadd.f32 0.0, %v179
    %v181 = vpop.f32.mrf.mxu0
    %v182 = vpop.f32.mrf.mxu0
    %v183 = vadd.f32 0.0, %v182
    %v184 = vpop.f32.mrf.mxu0
    %185 = vdwg.mxu0
    %v186 = vmul.f32 %v124, %v124
    %v187 = vmul.f32 %v127, %v127
    %v188 = vmul.f32 %v132, %v132
    %v189 = vmul.f32 %v135, %v135
    %v190 = vmul.f32 %v140, %v140
    %v191 = vmul.f32 %v143, %v143
    %v192 = vmul.f32 %v148, %v148
    %v193 = vmul.f32 %v151, %v151
    %v194 = vmul.f32 %v156, %v156
    %v195 = vmul.f32 %v159, %v159
    %v196 = vmul.f32 %v164, %v164
    %v197 = vmul.f32 %v167, %v167
    %v198 = vmul.f32 %v172, %v172
    %v199 = vmul.f32 %v175, %v175
    %v200 = vmul.f32 %v180, %v180
    %v201 = vmul.f32 %v183, %v183
    %202 = vadd.xlane.f32.xlu0 %v186
    %v203 = vpop.xlane.xlu0 %202
    %204 = vadd.xlane.f32.xlu0 %v187
    %v205 = vpop.xlane.xlu0 %204
    %206 = vadd.xlane.f32.xlu0 %v188
    %v207 = vpop.xlane.xlu0 %206
    %208 = vadd.xlane.f32.xlu0 %v189
    %v209 = vpop.xlane.xlu0 %208
    %210 = vadd.xlane.f32.xlu0 %v190
    %v211 = vpop.xlane.xlu0 %210
    %212 = vadd.xlane.f32.xlu0 %v191
    %v213 = vpop.xlane.xlu0 %212
    %214 = vadd.xlane.f32.xlu0 %v192
    %v215 = vpop.xlane.xlu0 %214
    %216 = vadd.xlane.f32.xlu0 %v193
    %v217 = vpop.xlane.xlu0 %216
    %218 = vadd.xlane.f32.xlu0 %v194
    %v219 = vpop.xlane.xlu0 %218
    %220 = vadd.xlane.f32.xlu0 %v195
    %v221 = vpop.xlane.xlu0 %220
    %222 = vadd.xlane.f32.xlu0 %v196
    %v223 = vpop.xlane.xlu0 %222
    %224 = vadd.xlane.f32.xlu0 %v197
    %v225 = vpop.xlane.xlu0 %224
    %226 = vadd.xlane.f32.xlu0 %v198
    %v227 = vpop.xlane.xlu0 %226
    %228 = vadd.xlane.f32.xlu0 %v199
    %v229 = vpop.xlane.xlu0 %228
    %230 = vadd.xlane.f32.xlu0 %v200
    %v231 = vpop.xlane.xlu0 %230
    %232 = vadd.xlane.f32.xlu0 %v201
    %v233 = vpop.xlane.xlu0 %232
    %v234 = vrsqrt.pop %v203
    %v235 = vrsqrt.pop %v205
    %v236 = vrsqrt.pop %v207
    %v237 = vrsqrt.pop %v209
    %v238 = vrsqrt.pop %v211
    %v239 = vrsqrt.pop %v213
    %v240 = vrsqrt.pop %v215
    %v241 = vrsqrt.pop %v217
    %v242 = vrsqrt.pop %v219
    %v243 = vrsqrt.pop %v221
    %v244 = vrsqrt.pop %v223
    %v245 = vrsqrt.pop %v225
    %v246 = vrsqrt.pop %v227
    %v247 = vrsqrt.pop %v229
    %v248 = vrsqrt.pop %v231
    %v249 = vrsqrt.pop %v233
    %v250 = vmul.f32 %v124, %v234
    %v251 = vmul.f32 %v127, %v235
    %v252 = vmul.f32 %v132, %v236
    %v253 = vmul.f32 %v135, %v237
    %v254 = vmul.f32 %v140, %v238
    %v255 = vmul.f32 %v143, %v239
    %v256 = vmul.f32 %v148, %v240
    %v257 = vmul.f32 %v151, %v241
    %v258 = vmul.f32 %v156, %v242
    %v259 = vmul.f32 %v159, %v243
    %v260 = vmul.f32 %v164, %v244
    %v261 = vmul.f32 %v167, %v245
    %v262 = vmul.f32 %v172, %v246
    %v263 = vmul.f32 %v175, %v247
    %v264 = vmul.f32 %v180, %v248
    %v265 = vmul.f32 %v183, %v249
    %v266 = vlaneseq
    %v267 = vshrl.u32 %v266, 7
    %v268 = vadd.s32 %v267, 8
    %v269 = vadd.s32 %v267, 16
    %v270 = vadd.s32 %v267, 24
    %v271 = vadd.s32 %v267, 32
    %v272 = vadd.s32 %v267, 40
    %v273 = vadd.s32 %v267, 48
    %v274 = vadd.s32 %v267, 56
    %v275 = vadd.s32 %v267, 64
    %v276 = vadd.s32 %v267, 72
    %v277 = vadd.s32 %v267, 80
    %v278 = vadd.s32 %v267, 88
    %v279 = vadd.s32 %v267, 96
    %v280 = vadd.s32 %v267, 104
    %v281 = vadd.s32 %v267, 112
    %v282 = vadd.s32 %v267, 120
    %vm283 = vcmp.lt.s32.totalorder %v267, 3
    %vm284 = vcmp.lt.s32.totalorder %v268, 3
    %vm285 = vcmp.lt.s32.totalorder %v269, 3
    %vm286 = vcmp.lt.s32.totalorder %v270, 3
    %vm287 = vcmp.lt.s32.totalorder %v271, 3
    %vm288 = vcmp.lt.s32.totalorder %v272, 3
    %vm289 = vcmp.lt.s32.totalorder %v273, 3
    %vm290 = vcmp.lt.s32.totalorder %v274, 3
    %vm291 = vcmp.lt.s32.totalorder %v275, 3
    %vm292 = vcmp.lt.s32.totalorder %v276, 3
    %vm293 = vcmp.lt.s32.totalorder %v277, 3
    %vm294 = vcmp.lt.s32.totalorder %v278, 3
    %vm295 = vcmp.lt.s32.totalorder %v279, 3
    %vm296 = vcmp.lt.s32.totalorder %v280, 3
    %vm297 = vcmp.lt.s32.totalorder %v281, 3
    %vm298 = vcmp.lt.s32.totalorder %v282, 3
    %v299 = vsel %vm283, 1, 0
    %v300 = vsel %vm284, 1, 0
    %v301 = vsel %vm285, 1, 0
    %v302 = vsel %vm286, 1, 0
    %v303 = vsel %vm287, 1, 0
    %v304 = vsel %vm288, 1, 0
    %v305 = vsel %vm289, 1, 0
    %v306 = vsel %vm290, 1, 0
    %v307 = vsel %vm291, 1, 0
    %v308 = vsel %vm292, 1, 0
    %v309 = vsel %vm293, 1, 0
    %v310 = vsel %vm294, 1, 0
    %v311 = vsel %vm295, 1, 0
    %v312 = vsel %vm296, 1, 0
    %v313 = vsel %vm297, 1, 0
    %v314 = vsel %vm298, 1, 0
    %vm315 = vcmp.eq.s32.totalorder %v299, 1
    %vm316 = vcmp.eq.s32.totalorder %v300, 1
    %vm317 = vcmp.eq.s32.totalorder %v301, 1
    %vm318 = vcmp.eq.s32.totalorder %v302, 1
    %vm319 = vcmp.eq.s32.totalorder %v303, 1
    %vm320 = vcmp.eq.s32.totalorder %v304, 1
    %vm321 = vcmp.eq.s32.totalorder %v305, 1
    %vm322 = vcmp.eq.s32.totalorder %v306, 1
    %vm323 = vcmp.eq.s32.totalorder %v307, 1
    %vm324 = vcmp.eq.s32.totalorder %v308, 1
    %vm325 = vcmp.eq.s32.totalorder %v309, 1
    %vm326 = vcmp.eq.s32.totalorder %v310, 1
    %vm327 = vcmp.eq.s32.totalorder %v311, 1
    %vm328 = vcmp.eq.s32.totalorder %v312, 1
    %vm329 = vcmp.eq.s32.totalorder %v313, 1
    %vm330 = vcmp.eq.s32.totalorder %v314, 1
    %v331 = vsel %vm315, %v250, 0.0
    %v332 = vsel %vm316, %v251, 0.0
    %v333 = vsel %vm317, %v252, 0.0
    %v334 = vsel %vm318, %v253, 0.0
    %v335 = vsel %vm319, %v254, 0.0
    %v336 = vsel %vm320, %v255, 0.0
    %v337 = vsel %vm321, %v256, 0.0
    %v338 = vsel %vm322, %v257, 0.0
    %v339 = vsel %vm323, %v258, 0.0
    %v340 = vsel %vm324, %v259, 0.0
    %v341 = vsel %vm325, %v260, 0.0
    %v342 = vsel %vm326, %v261, 0.0
    %v343 = vsel %vm327, %v262, 0.0
    %v344 = vsel %vm328, %v263, 0.0
    %v345 = vsel %vm329, %v264, 0.0
    %v346 = vsel %vm330, %v265, 0.0
    %347 = vxpose.xlu0.b32.start [1/16] %v331, 128
    %348 = vxpose.xlu0.b32.cont [2/16] %v332, 128
    %349 = vxpose.xlu0.b32.cont [3/16] %v333, 128
    %350 = vxpose.xlu0.b32.cont [4/16] %v334, 128
    %351 = vxpose.xlu0.b32.cont [5/16] %v335, 128
    %352 = vxpose.xlu0.b32.cont [6/16] %v336, 128
    %353 = vxpose.xlu0.b32.cont [7/16] %v337, 128
    %354 = vxpose.xlu0.b32.cont [8/16] %v338, 128
    %355 = vxpose.xlu0.b32.cont [9/16] %v339, 128
    %356 = vxpose.xlu0.b32.cont [10/16] %v340, 128
    %357 = vxpose.xlu0.b32.cont [11/16] %v341, 128
    %358 = vxpose.xlu0.b32.cont [12/16] %v342, 128
    %359 = vxpose.xlu0.b32.cont [13/16] %v343, 128
    %360 = vxpose.xlu0.b32.cont [14/16] %v344, 128
    %361 = vxpose.xlu0.b32.cont [15/16] %v345, 128
    %362 = vxpose.xlu0.b32.end [16/16] %v346, 128
    %v363 = vpop.trf.xlu0
    %v364 = vpop.trf.xlu0
    %v365 = vpop.trf.xlu0
    %v366 = vpop.trf.xlu0
    %v367 = vpop.trf.xlu0
    %v368 = vpop.trf.xlu0
    %v369 = vpop.trf.xlu0
    %v370 = vpop.trf.xlu0
    %v371 = vpop.trf.xlu0
    %v372 = vpop.trf.xlu0
    %v373 = vpop.trf.xlu0
    %v374 = vpop.trf.xlu0
    %v375 = vpop.trf.xlu0
    %v376 = vpop.trf.xlu0
    %v377 = vpop.trf.xlu0
    %v378 = vpop.trf.xlu0
    %v379 = vpack.c.bf16 %v364, %v363
    %v380 = vpack.c.bf16 %v366, %v365
    %v381 = vpack.c.bf16 %v368, %v367
    %v382 = vpack.c.bf16 %v370, %v369
    %v383 = vpack.c.bf16 %v372, %v371
    %v384 = vpack.c.bf16 %v374, %v373
    %v385 = vpack.c.bf16 %v376, %v375
    %v386 = vpack.c.bf16 %v378, %v377
    %v395 = vunpack.c.l.b16 %v379
    %v396 = vunpack.c.h.b16 %v379
    %v397 = vunpack.c.l.b16 %v380
    %v398 = vunpack.c.h.b16 %v380
    %v399 = vunpack.c.l.b16 %v381
    %v400 = vunpack.c.h.b16 %v381
    %v401 = vunpack.c.l.b16 %v382
    %v402 = vunpack.c.h.b16 %v382
    %v403 = vunpack.c.l.b16 %v383
    %v404 = vunpack.c.h.b16 %v383
    %v405 = vunpack.c.l.b16 %v384
    %v406 = vunpack.c.h.b16 %v384
    %v407 = vunpack.c.l.b16 %v385
    %v408 = vunpack.c.h.b16 %v385
    %v409 = vunpack.c.l.b16 %v386
    %v410 = vunpack.c.h.b16 %v386
    %v411 = vpack.c.b16 %v395, %v395
    %v412 = vpack.c.b16 %v396, %v396
    %v413 = vpack.c.b16 %v397, %v397
    %v414 = vpack.c.b16 %v398, %v398
    %v415 = vpack.c.b16 %v399, %v399
    %v416 = vpack.c.b16 %v400, %v400
    %v417 = vpack.c.b16 %v401, %v401
    %v418 = vpack.c.b16 %v402, %v402
    %v419 = vpack.c.b16 %v403, %v403
    %v420 = vpack.c.b16 %v404, %v404
    %v421 = vpack.c.b16 %v405, %v405
    %v422 = vpack.c.b16 %v406, %v406
    %v423 = vpack.c.b16 %v407, %v407
    %v424 = vpack.c.b16 %v408, %v408
    %v425 = vpack.c.b16 %v409, %v409
    %v426 = vpack.c.b16 %v410, %v410
    %443 = vst [vmem:[#allocation7] sm:$0xf] %v411
    %444 = vst [vmem:[#allocation7 + $0x4] sm:$0xf] %v412
    %445 = vst [vmem:[#allocation7 + $0x8] sm:$0xf] %v413
    %446 = vst [vmem:[#allocation7 + $0xc] sm:$0xf] %v414
    %447 = vst [vmem:[#allocation7 + $0x10] sm:$0xf] %v415
    %448 = vst [vmem:[#allocation7 + $0x14] sm:$0xf] %v416
    %449 = vst [vmem:[#allocation7 + $0x18] sm:$0xf] %v417
    %450 = vst [vmem:[#allocation7 + $0x1c] sm:$0xf] %v418
    %451 = vst [vmem:[#allocation7 + $0x20] sm:$0xf] %v419
    %452 = vst [vmem:[#allocation7 + $0x24] sm:$0xf] %v420
    %453 = vst [vmem:[#allocation7 + $0x28] sm:$0xf] %v421
    %454 = vst [vmem:[#allocation7 + $0x2c] sm:$0xf] %v422
    %455 = vst [vmem:[#allocation7 + $0x30] sm:$0xf] %v423
    %456 = vst [vmem:[#allocation7 + $0x34] sm:$0xf] %v424
    %457 = vst [vmem:[#allocation7 + $0x38] sm:$0xf] %v425
    %458 = vst [vmem:[#allocation7 + $0x3c] sm:$0xf] %v426
    // Predicated region
    $region18: #{tpu_custom_call.1} parent=1 // pred_check
      _
    $region19: #{tpu_custom_call.1} parent=1 // pred_check_branch
      %460 = sbr.rel (0) target = $region21
    $region20: #{tpu_custom_call.1} parent=1 // pred_region
      %s462 = ssub.s32 1024, 1024
      %463 = vsyncadd [#allocation4], %s462
      %s464 = sshll.u32 [#allocation7], 4
      %s465 = int_to_ptr.vmem [resolvable:$true] %s464
      %470 = dma.vmem_to_hbm [thread:$0]  %s465, 1024, %s2, [#allocation4], 64, 64, 4
    $region21: #{tpu_custom_call.1} parent=1 // pred_fallthru
      _
    // Predicated region
    $region22: #{tpu_custom_call.1} parent=1 // pred_check
      _
    $region23: #{tpu_custom_call.1} parent=1 // pred_check_branch
      %472 = sbr.rel (0) target = $region25
    $region24: #{tpu_custom_call.1} parent=1 // pred_region
      %473 = dma.done [#allocation4], 1024
    $region25: #{tpu_custom_call.1} parent=1 // pred_fallthru
      _
    %474 = vsyncpa [#allocation3], 1
    %475 = vsyncpa [#allocation6], 1
    %476 = vsyncpa [#allocation4], 1

</llo_original>
